<compile_context>
chip_gen: v7x
topology: tpu7x:2x2x1
jax: 0.10.0
libtpu: 0.0.40
codegen_flags: <defaults>
</compile_context>

<pallas_src>
import jax
import jax.numpy as jnp
from jax.experimental import pallas as pl
from jax.experimental.pallas import tpu as pltpu


_TILE_BYTES = 4 * 1024 * 1024      # ~4 MiB per tile buffer (in + out, double buffered)
_VMEM_LIMIT = 32 * 1024 * 1024     # safe on v5e/v6e (128 MiB phys) and v7x (64 MiB phys)


def _affine_kernel(x_ref, o_ref):
    # ((x + 2) * 3) / 2 - 1  ==  x * 1.5 + 2   (2 VALU ops, no divide)
    dt = o_ref.dtype
    x = x_ref[...].astype(dt)          # fused int/bool -> float promotion
    o_ref[...] = x * jnp.asarray(1.5, dt) + jnp.asarray(2.0, dt)


def _sublane_multiple(itemsize):
    # Minimum sublane granularity per dtype width: f32 -> 8, bf16/f16 -> 16, int8/bool -> 32.
    return 8 * max(1, 4 // max(1, itemsize))


def _pick_2d(x):
    """Pick a free (contiguous-reshape) 2-D view, lane-dense when size permits."""
    n = x.size
    for lanes in (512, 256, 128):
        if n % lanes == 0:
            return n // lanes, lanes
    c = x.shape[-1] if x.ndim >= 1 else 1
    return n // c, c


@jax.jit
def _affine_one(x):
    # torch true-division promotes integer / bool inputs to float32.
    out_dtype = x.dtype if jnp.issubdtype(x.dtype, jnp.floating) else jnp.float32
    if x.size == 0:
        return jnp.zeros(x.shape, out_dtype)

    R, C = _pick_2d(x)
    x2 = x.reshape(R, C)

    in_item = x2.dtype.itemsize
    out_item = jnp.dtype(out_dtype).itemsize
    sub = max(_sublane_multiple(in_item), _sublane_multiple(out_item))

    if R <= sub:
        tile_rows = R                      # full-extent block (always legal)
    else:
        widest = max(in_item, out_item)
        max_rows = max(sub, (_TILE_BYTES // (C * widest)) // sub * sub)
        half = -(-R // 2)                  # cdiv(R, 2): keep grid >= 2 when rows permit
        half = -(-half // sub) * sub       # round up to the sublane multiple
        tile_rows = min(max_rows, half)

    out2 = pl.pallas_call(
        _affine_kernel,
        out_shape=jax.ShapeDtypeStruct((R, C), out_dtype),
        grid=(pl.cdiv(R, tile_rows),),
        in_specs=[pl.BlockSpec((tile_rows, C), lambda i: (i, 0))],
        out_specs=pl.BlockSpec((tile_rows, C), lambda i: (i, 0)),
        compiler_params=pltpu.CompilerParams(
            dimension_semantics=("parallel",),
            vmem_limit_bytes=_VMEM_LIMIT),
    )(x2)
    return out2.reshape(x.shape)


def pt_module_forward(inputs):
    """Mirrors PtModule.forward: list of arrays in, list of arrays out."""
    return [_affine_one(jnp.asarray(t)) for t in inputs]


if __name__ == "__main__":
    key = jax.random.PRNGKey(0)
    k1, k2, k3, k4 = jax.random.split(key, 4)
    # Small, representative shapes (NCHW feature map, seq tensor, matrix, int tensor).
    inputs = [
        jax.random.normal(k1, (2, 4, 16, 16), dtype=jnp.float32),
        jax.random.normal(k2, (2, 8, 32), dtype=jnp.float32),
        jax.random.normal(k3, (8, 128), dtype=jnp.float32),
        jax.random.randint(k4, (4, 100), minval=-50, maxval=50, dtype=jnp.int32),
    ]

    outs = pt_module_forward(inputs)
    for o in outs:
        jax.block_until_ready(o)

    # Sanity-check against a pure-JAX reference of the PyTorch semantics.
    for x, o in zip(inputs, outs):
        expect_dtype = x.dtype if jnp.issubdtype(x.dtype, jnp.floating) else jnp.float32
        ref = (x.astype(expect_dtype) + 2.0) * 3.0 / 2.0 - 1.0
        assert o.shape == x.shape and o.dtype == expect_dtype
        assert jnp.allclose(o, ref, atol=1e-5, rtol=1e-5), "mismatch vs reference"

    print("KERNEL_OK")
</pallas_src>

<mosaic_0001>
module attributes {stable_mosaic.version = 11 : i64} {
  func.func @_affine_kernel(%arg0: i32, %arg1: memref<4x512xf32, #tpu.memory_space<vmem>>, %arg2: memref<4x512xf32, #tpu.memory_space<vmem>>) attributes {dimension_semantics = [#tpu.dimension_semantics<parallel>], iteration_bounds = array<i64: 1>, scalar_prefetch = 0 : i64, scratch_operands = 0 : i64, tpu.core_type = #tpu.core_type<tc>, window_params = [{transform_indices = @transform_0, window_bounds = array<i64: 4, 512>}, {transform_indices = @transform_1, window_bounds = array<i64: 4, 512>}]} {
    %c0 = arith.constant 0 : index
    %c0_0 = arith.constant 0 : index
    %0 = vector.load %arg1[%c0, %c0_0] : memref<4x512xf32, #tpu.memory_space<vmem>>, vector<4x512xf32>
    %cst = arith.constant 1.500000e+00 : f32
    %1 = vector.broadcast %cst : f32 to vector<4x512xf32>
    %2 = arith.mulf %0, %1 : vector<4x512xf32>
    %cst_1 = arith.constant 2.000000e+00 : f32
    %3 = vector.broadcast %cst_1 : f32 to vector<4x512xf32>
    %4 = arith.addf %2, %3 : vector<4x512xf32>
    %c0_2 = arith.constant 0 : index
    %c0_3 = arith.constant 0 : index
    %5 = vector.load %arg2[%c0_2, %c0_3] : memref<4x512xf32, #tpu.memory_space<vmem>>, vector<4x512xf32>
    tpu.vector_store %arg2[%c0_2, %c0_3], %4 {strides = array<i32>} : memref<4x512xf32, #tpu.memory_space<vmem>>, vector<4x512xf32>,
    return
  }
  func.func @transform_0(%arg0: i32) -> (i32, i32) {
    %c0_i32 = arith.constant 0 : i32
    %c0_i32_0 = arith.constant 0 : i32
    return %arg0, %c0_i32 : i32, i32
  }
  func.func @transform_1(%arg0: i32) -> (i32, i32) {
    %c0_i32 = arith.constant 0 : i32
    %c0_i32_0 = arith.constant 0 : i32
    return %arg0, %c0_i32 : i32, i32
  }
}

</mosaic_0001>

<llo_original>
// kernel: _affine_one.1
$region0: #{_affine_one.1}
  #allocation0 [shape = 'u32[]', space=smem, size = 0x4, offset = 0x4, fixed_abs, tag = 'smem constant byte address 0x4 - core index']
  #allocation1 [shape = 'u32[144,128]{1,0:T(1,128)}', space=vmem, size = 0x12000, scoped, tag = 'internal scratch']
  %s0 = inlined_call_operand.vmem [shape: f32[4,512], index: 0, kind: input, shape index: {}]
  %s1 = inlined_call_operand.vmem [shape: f32[4,512], index: 1, kind: output, shape index: {}]
  %s2 = sld [smem:[#allocation0]]
  $region14: #{_affine_one.1} parent=0
    _
  %s4 = ssub.s32 1, %s2
  %s5 = scalar_select 0, %s4, %s2
  // Predicated region
  $region2: #{_affine_one.1} parent=0 // pred_check
    _
  $region3: #{_affine_one.1} parent=0 // pred_check_branch
    %7 = sbr.rel (0) target = $region5
  $region4: #{_affine_one.1} parent=0 // pred_region
    _
  $region5: #{_affine_one.1} parent=0 // pred_fallthru
    _
  %v8 = vld [vmem:[%s0] sm:$0xff]
  %v9 = vld [vmem:[%s0 + $0x8] sm:$0xff]
  %v10 = vmul.f32 %v8, 1.5
  %v11 = vmul.f32 %v9, 1.5
  %v12 = vadd.f32 %v10, 2.0
  %v13 = vadd.f32 %v11, 2.0
  %14 = vst [vmem:[%s1] sm:$0xff] %v12
  %15 = vst [vmem:[%s1 + $0x8] sm:$0xff] %v13
  // Predicated region
  $region6: #{_affine_one.1} parent=0 // pred_check
    _
  $region7: #{_affine_one.1} parent=0 // pred_check_branch
    %17 = sbr.rel (0) target = $region9
  $region8: #{_affine_one.1} parent=0 // pred_region
    _
  $region9: #{_affine_one.1} parent=0 // pred_fallthru
    _
  // Predicated region
  $region10: #{_affine_one.1} parent=0 // pred_check
    _
  $region11: #{_affine_one.1} parent=0 // pred_check_branch
    %19 = sbr.rel (0) target = $region13
  $region12: #{_affine_one.1} parent=0 // pred_region
    _
  $region13: #{_affine_one.1} parent=0 // pred_fallthru
    _

</llo_original>
